<compile_context>
chip_gen: v7x
topology: tpu7x:2x2x1
jax: 0.10.0
libtpu: 0.0.40
codegen_flags: <defaults>
</compile_context>

<pallas_src>
import functools
import math

import jax
import jax.numpy as jnp
from jax.experimental import pallas as pl
from jax.experimental.pallas import tpu as pltpu


# ---------------------------------------------------------------------------
# Pallas kernel: full MLP forward for one batch tile, feature-first layout.
# ---------------------------------------------------------------------------
def _make_mlp_kernel(num_layers: int):
    """Kernel signature: (x_ref, w0, b0, w1, b1, ..., o_ref).

      x_ref : [n_in,  TB]   batch tile on the 128-lane axis
      w_l   : [out_l, in_l] VMEM-resident across all grid steps
      b_l   : [out_l, 1]    broadcast across lanes
      o_ref : [n_out, TB]
    ReLU after every layer except the last (build_network pops the last one).
    """

    def kernel(*refs):
        x_ref = refs[0]
        o_ref = refs[-1]
        h = x_ref[...]                                   # f32, no cast needed
        for layer in range(num_layers):
            w = refs[1 + 2 * layer][...]                 # [out, in]
            b = refs[2 + 2 * layer][...]                 # [out, 1]
            h = jnp.dot(w, h, preferred_element_type=jnp.float32) + b
            if layer < num_layers - 1:
                h = jnp.maximum(h, 0.0)
        o_ref[...] = h.astype(o_ref.dtype)

    return kernel


# ---------------------------------------------------------------------------
# Parameter init: torch.nn.Linear default U(-1/sqrt(fan_in), 1/sqrt(fan_in)).
# Weights stored in PyTorch layout [out, in]; biases as [out, 1].
# ---------------------------------------------------------------------------
def init_params(key, n_in, n_hidden, n_out):
    arch = [n_in] + list(n_hidden) + [n_out]
    params = []
    for fan_in, fan_out in zip(arch, arch[1:]):
        key, kw, kb = jax.random.split(key, 3)
        bound = 1.0 / math.sqrt(fan_in)
        w = jax.random.uniform(kw, (fan_out, fan_in), jnp.float32, -bound, bound)
        b = jax.random.uniform(kb, (fan_out, 1), jnp.float32, -bound, bound)
        params.append((w, b))
    return params


def _pick_batch_tile(batch: int) -> int:
    """Largest lane-dense tile that keeps padding waste and step count sane."""
    if batch >= 2048:
        return 512
    if batch >= 512:
        return 256
    return 128


# ---------------------------------------------------------------------------
# Wrapper: pad batch to a tile multiple, transpose to feature-first, run the
# batch-tiled pallas_call, transpose back.
# ---------------------------------------------------------------------------
@functools.partial(jax.jit, static_argnames=("num_layers",))
def _mlp_pallas(x, flat_params, num_layers):
    batch, n_in = x.shape
    n_out = flat_params[-2].shape[0]              # last weight is [n_out, in]

    tb = _pick_batch_tile(batch)
    padded = pl.cdiv(batch, tb) * tb

    # Feature-first [n_in, padded_batch]; zero-pad the tail tile (padding is
    # sliced off again after the call, so bias-only garbage there is harmless).
    x_t = jnp.pad(x.T, ((0, 0), (0, padded - batch)))

    grid = (padded // tb,)
    kernel = _make_mlp_kernel(num_layers)

    # The x tile streams along the grid; weights/biases are whole, resident
    # blocks (index_map constant -> DMA'd once, reused every step).
    in_specs = [pl.BlockSpec((n_in, tb), lambda i: (0, i))]
    for p in flat_params:
        in_specs.append(pl.BlockSpec(p.shape, lambda i: (0, 0)))
    out_spec = pl.BlockSpec((n_out, tb), lambda i: (0, i))

    # Advisory cost estimate so XLA schedules/overlaps the custom call sensibly.
    flops = 0
    for layer in range(num_layers):
        w = flat_params[2 * layer]
        flops += 2 * padded * w.shape[0] * w.shape[1]
    param_bytes = sum(int(p.size) * p.dtype.itemsize for p in flat_params)
    bytes_accessed = padded * (n_in + n_out) * 4 + param_bytes

    out_t = pl.pallas_call(
        kernel,
        out_shape=jax.ShapeDtypeStruct((n_out, padded), jnp.float32),
        grid=grid,
        in_specs=in_specs,
        out_specs=out_spec,
        compiler_params=pltpu.CompilerParams(
            dimension_semantics=("parallel",),    # megacore sharding on v7x
        ),
        cost_estimate=pl.CostEstimate(
            flops=flops, transcendentals=0, bytes_accessed=bytes_accessed),
    )(x_t, *flat_params)

    return out_t[:, :batch].T                     # back to [batch, n_out]


def costum_nn_forward(x, params):
    """Mirrors Costum_NN.forward: returns (network(coordinates), coordinates)."""
    flat = []
    for w, b in params:
        flat.extend([w, b])
    out = _mlp_pallas(x, tuple(flat), num_layers=len(params))
    # TODO(synk): requires_grad_(True) on `coordinates` has no Pallas analogue;
    # the returned `x` plays the role of the coordinates tensor.
    return out, x


# ---------------------------------------------------------------------------
# Pure-JAX reference for a sanity check.
# ---------------------------------------------------------------------------
def reference_forward(x, params):
    h = x
    for i, (w, b) in enumerate(params):
        h = h @ w.T + b[:, 0]
        if i < len(params) - 1:
            h = jnp.maximum(h, 0.0)
    return h


if __name__ == "__main__":
    key = jax.random.PRNGKey(0)
    k_x, k_p = jax.random.split(key)

    # Small coordinate-MLP: n_in=4, n_hidden=[32, 16], n_out=2.
    # batch=1000 exercises the batch-tiled grid plus the tail-padding path.
    n_in, n_hidden, n_out = 4, [32, 16], 2
    batch = 1000

    x = jax.random.normal(k_x, (batch, n_in), jnp.float32)
    params = init_params(k_p, n_in, n_hidden, n_out)

    out, coords = costum_nn_forward(x, params)
    out = jax.block_until_ready(out)

    ref = reference_forward(x, params)
    assert out.shape == (batch, n_out)
    assert coords.shape == (batch, n_in)
    assert jnp.allclose(out, ref, atol=1e-5, rtol=1e-5), "mismatch vs reference"

    print("KERNEL_OK")
</pallas_src>

<mosaic_0001>
module attributes {stable_mosaic.version = 11 : i64} {
  func.func @kernel(%arg0: i32, %arg1: memref<4x256xf32, #tpu.memory_space<vmem>>, %arg2: memref<32x4xf32, #tpu.memory_space<vmem>>, %arg3: memref<32x1xf32, #tpu.memory_space<vmem>>, %arg4: memref<16x32xf32, #tpu.memory_space<vmem>>, %arg5: memref<16x1xf32, #tpu.memory_space<vmem>>, %arg6: memref<2x16xf32, #tpu.memory_space<vmem>>, %arg7: memref<2x1xf32, #tpu.memory_space<vmem>>, %arg8: memref<2x256xf32, #tpu.memory_space<vmem>>) attributes {dimension_semantics = [#tpu.dimension_semantics<parallel>], iteration_bounds = array<i64: 4>, scalar_prefetch = 0 : i64, scratch_operands = 0 : i64, tpu.core_type = #tpu.core_type<tc>, window_params = [{transform_indices = @transform_0, window_bounds = array<i64: 4, 256>}, {pipeline_mode = #tpu.pipeline_mode<synchronous>, transform_indices = @transform_1, window_bounds = array<i64: 32, 4>}, {pipeline_mode = #tpu.pipeline_mode<synchronous>, transform_indices = @transform_2, window_bounds = array<i64: 32, 1>}, {pipeline_mode = #tpu.pipeline_mode<synchronous>, transform_indices = @transform_3, window_bounds = array<i64: 16, 32>}, {pipeline_mode = #tpu.pipeline_mode<synchronous>, transform_indices = @transform_4, window_bounds = array<i64: 16, 1>}, {pipeline_mode = #tpu.pipeline_mode<synchronous>, transform_indices = @transform_5, window_bounds = array<i64: 2, 16>}, {pipeline_mode = #tpu.pipeline_mode<synchronous>, transform_indices = @transform_6, window_bounds = array<i64: 2, 1>}, {transform_indices = @transform_7, window_bounds = array<i64: 2, 256>}]} {
    %c0 = arith.constant 0 : index
    %c0_0 = arith.constant 0 : index
    %0 = vector.load %arg1[%c0, %c0_0] : memref<4x256xf32, #tpu.memory_space<vmem>>, vector<4x256xf32>
    %c0_1 = arith.constant 0 : index
    %c0_2 = arith.constant 0 : index
    %1 = vector.load %arg2[%c0_1, %c0_2] : memref<32x4xf32, #tpu.memory_space<vmem>>, vector<32x4xf32>
    %c0_3 = arith.constant 0 : index
    %c0_4 = arith.constant 0 : index
    %2 = vector.load %arg3[%c0_3, %c0_4] : memref<32x1xf32, #tpu.memory_space<vmem>>, vector<32x1xf32>
    %cst = arith.constant dense<0.000000e+00> : vector<32x256xf32>
    %3 = tpu.matmul %1, %0, %cst {dimension_numbers = #tpu.dot_dimension_numbers<[1], [0], [0], [1], [0, 0, 1, 1], [], []>} : vector<32x4xf32>, vector<4x256xf32>, vector<32x256xf32> -> vector<32x256xf32>
    %4 = vector.broadcast %2 : vector<32x1xf32> to vector<32x256xf32>
    %5 = arith.addf %3, %4 : vector<32x256xf32>
    %cst_5 = arith.constant 0.000000e+00 : f32
    %6 = vector.broadcast %cst_5 : f32 to vector<32x256xf32>
    %7 = arith.maximumf %5, %6 : vector<32x256xf32>
    %c0_6 = arith.constant 0 : index
    %c0_7 = arith.constant 0 : index
    %8 = vector.load %arg4[%c0_6, %c0_7] : memref<16x32xf32, #tpu.memory_space<vmem>>, vector<16x32xf32>
    %c0_8 = arith.constant 0 : index
    %c0_9 = arith.constant 0 : index
    %9 = vector.load %arg5[%c0_8, %c0_9] : memref<16x1xf32, #tpu.memory_space<vmem>>, vector<16x1xf32>
    %cst_10 = arith.constant dense<0.000000e+00> : vector<16x256xf32>
    %10 = tpu.matmul %8, %7, %cst_10 {dimension_numbers = #tpu.dot_dimension_numbers<[1], [0], [0], [1], [0, 0, 1, 1], [], []>} : vector<16x32xf32>, vector<32x256xf32>, vector<16x256xf32> -> vector<16x256xf32>
    %11 = vector.broadcast %9 : vector<16x1xf32> to vector<16x256xf32>
    %12 = arith.addf %10, %11 : vector<16x256xf32>
    %cst_11 = arith.constant 0.000000e+00 : f32
    %13 = vector.broadcast %cst_11 : f32 to vector<16x256xf32>
    %14 = arith.maximumf %12, %13 : vector<16x256xf32>
    %c0_12 = arith.constant 0 : index
    %c0_13 = arith.constant 0 : index
    %15 = vector.load %arg6[%c0_12, %c0_13] : memref<2x16xf32, #tpu.memory_space<vmem>>, vector<2x16xf32>
    %c0_14 = arith.constant 0 : index
    %c0_15 = arith.constant 0 : index
    %16 = vector.load %arg7[%c0_14, %c0_15] : memref<2x1xf32, #tpu.memory_space<vmem>>, vector<2x1xf32>
    %cst_16 = arith.constant dense<0.000000e+00> : vector<2x256xf32>
    %17 = tpu.matmul %15, %14, %cst_16 {dimension_numbers = #tpu.dot_dimension_numbers<[1], [0], [0], [1], [0, 0, 1, 1], [], []>} : vector<2x16xf32>, vector<16x256xf32>, vector<2x256xf32> -> vector<2x256xf32>
    %18 = vector.broadcast %16 : vector<2x1xf32> to vector<2x256xf32>
    %19 = arith.addf %17, %18 : vector<2x256xf32>
    %c0_17 = arith.constant 0 : index
    %c0_18 = arith.constant 0 : index
    %20 = vector.load %arg8[%c0_17, %c0_18] : memref<2x256xf32, #tpu.memory_space<vmem>>, vector<2x256xf32>
    tpu.vector_store %arg8[%c0_17, %c0_18], %19 {strides = array<i32>} : memref<2x256xf32, #tpu.memory_space<vmem>>, vector<2x256xf32>,
    return
  }
  func.func @transform_0(%arg0: i32) -> (i32, i32) {
    %c0_i32 = arith.constant 0 : i32
    %c0_i32_0 = arith.constant 0 : i32
    return %c0_i32, %arg0 : i32, i32
  }
  func.func @transform_1(%arg0: i32) -> (i32, i32) {
    %c0_i32 = arith.constant 0 : i32
    %c0_i32_0 = arith.constant 0 : i32
    %c0_i32_1 = arith.constant 0 : i32
    return %c0_i32, %c0_i32_0 : i32, i32
  }
  func.func @transform_2(%arg0: i32) -> (i32, i32) {
    %c0_i32 = arith.constant 0 : i32
    %c0_i32_0 = arith.constant 0 : i32
    %c0_i32_1 = arith.constant 0 : i32
    return %c0_i32, %c0_i32_0 : i32, i32
  }
  func.func @transform_3(%arg0: i32) -> (i32, i32) {
    %c0_i32 = arith.constant 0 : i32
    %c0_i32_0 = arith.constant 0 : i32
    %c0_i32_1 = arith.constant 0 : i32
    return %c0_i32, %c0_i32_0 : i32, i32
  }
  func.func @transform_4(%arg0: i32) -> (i32, i32) {
    %c0_i32 = arith.constant 0 : i32
    %c0_i32_0 = arith.constant 0 : i32
    %c0_i32_1 = arith.constant 0 : i32
    return %c0_i32, %c0_i32_0 : i32, i32
  }
  func.func @transform_5(%arg0: i32) -> (i32, i32) {
    %c0_i32 = arith.constant 0 : i32
    %c0_i32_0 = arith.constant 0 : i32
    %c0_i32_1 = arith.constant 0 : i32
    return %c0_i32, %c0_i32_0 : i32, i32
  }
  func.func @transform_6(%arg0: i32) -> (i32, i32) {
    %c0_i32 = arith.constant 0 : i32
    %c0_i32_0 = arith.constant 0 : i32
    %c0_i32_1 = arith.constant 0 : i32
    return %c0_i32, %c0_i32_0 : i32, i32
  }
  func.func @transform_7(%arg0: i32) -> (i32, i32) {
    %c0_i32 = arith.constant 0 : i32
    %c0_i32_0 = arith.constant 0 : i32
    return %c0_i32, %arg0 : i32, i32
  }
}

</mosaic_0001>

<llo_original>
// kernel: _mlp_pallas.1
$region0: #{_mlp_pallas.1}
  #allocation0 [shape = 'u32[]', space=smem, size = 0x4, offset = 0x4, fixed_abs, tag = 'smem constant byte address 0x4 - core index']
  #allocation1 [shape = 'u32[144,128]{1,0:T(1,128)}', space=vmem, size = 0x12000, scoped, tag = 'internal scratch']
  %s0 = inlined_call_operand.vmem [shape: f32[4,1024], index: 0, kind: input, shape index: {}]
  %s1 = inlined_call_operand.vmem [shape: f32[32,4], index: 1, kind: input, shape index: {}]
  %s2 = inlined_call_operand.vmem [shape: f32[32,1], index: 2, kind: input, shape index: {}]
  %s3 = inlined_call_operand.vmem [shape: f32[16,32], index: 3, kind: input, shape index: {}]
  %s4 = inlined_call_operand.vmem [shape: f32[16,1], index: 4, kind: input, shape index: {}]
  %s5 = inlined_call_operand.vmem [shape: f32[2,16], index: 5, kind: input, shape index: {}]
  %s6 = inlined_call_operand.vmem [shape: f32[2,1], index: 6, kind: input, shape index: {}]
  %s7 = inlined_call_operand.vmem [shape: f32[2,1024], index: 7, kind: output, shape index: {}]
  %s8 = sld [smem:[#allocation0]]
  $region61: #{_mlp_pallas.1} parent=0
    _
  %s10 = ssub.s32 1, %s8
  %s11 = scalar_select 0, %s10, %s8
  loop: start=0, step=1, limit=6
  $region2: #{_mlp_pallas.1} parent=0 // loop_pre_header
    _
  $region3: #{_mlp_pallas.1} parent=0 // loop_header
    %s13 = sphi 0, %s17
    %p14 = scmp.ge.s32.totalorder %s13, 6
    %s23 = sphi 0, %s25
    %s26 = sphi 0, %s23
    %s27 = sphi 0, %s26
    %s43 = sphi 0, %s27
    %s47 = sphi 0, %s47
    %s49 = sphi 0, %s47
    %s50 = sphi 0, %s49
    %s64 = sphi 0, %s50
    %s68 = sphi 0, %s68
    %s70 = sphi 0, %s68
    %s71 = sphi 0, %s70
    %s85 = sphi 0, %s71
    %s89 = sphi 0, %s89
    %s91 = sphi 0, %s89
    %s92 = sphi 0, %s91
    %s106 = sphi 0, %s92
    %s110 = sphi 0, %s110
    %s112 = sphi 0, %s110
    %s113 = sphi 0, %s112
    %s127 = sphi 0, %s113
    %s131 = sphi 0, %s131
    %s133 = sphi 0, %s131
    %s134 = sphi 0, %s133
    %s148 = sphi 0, %s134
    %s152 = sphi 0, %s152
    %s154 = sphi 0, %s152
    %s155 = sphi 0, %s154
    %s169 = sphi 0, %s155
    %s175 = sphi 0, %s177
    %s178 = sphi 0, %s175
    %s179 = sphi 0, %s178
    %s195 = sphi 0, %s179
  $region4: #{_mlp_pallas.1} parent=0 // loop_header_branch
    %16 = sbr.rel (%p14) target = $region8
  $region5: #{_mlp_pallas.1} parent=0 // loop_body
    %s18 = ssub.s32 %s13, 1
    %s19 = ssub.s32 %s13, 2
    %s20 = sadd.s32 %s13, 1
    %s21 = ssub.s32 %s13, %s20
    %p22 = scmp.eq.s32.totalorder %s21, 0
    %s24 = sadd.s32 %s23, 1
    %s25 = scalar_select %p22, %s23, %s24
    %p28 = pneg %p22
    %p29 = scmp.eq.s32.totalorder %s13, 3
    %p30 = por %p28, %p29
    %p31 = scmp.ne.s32.totalorder %s23, %s26
    %p32 = scmp.eq.s32.totalorder %s13, 0
    %p33 = por %p31, %p32
    %p34 = scmp.ne.s32.totalorder %s23, %s26
    %p35 = scmp.eq.s32.totalorder %s18, 3
    %p36 = por %p34, %p35
    %p37 = scmp.ne.s32.totalorder %s26, %s27
    %p38 = scmp.eq.s32.totalorder %s18, 0
    %p39 = por %p37, %p38
    %p40 = scmp.ne.s32.totalorder %s26, %s27
    %p41 = scmp.eq.s32.totalorder %s19, 3
    %p42 = por %p40, %p41
    %p44 = scmp.ne.s32.totalorder %s27, %s43
    %p45 = scmp.eq.s32.totalorder %s19, 0
    %p46 = por %p44, %p45
    %s48 = sadd.s32 %s47, 1
    %p51 = scmp.eq.s32.totalorder %s13, 3
    %p52 = scmp.ne.s32.totalorder %s47, %s49
    %p53 = scmp.eq.s32.totalorder %s13, 0
    %p54 = por %p52, %p53
    %p55 = scmp.ne.s32.totalorder %s47, %s49
    %p56 = scmp.eq.s32.totalorder %s18, 3
    %p57 = por %p55, %p56
    %p58 = scmp.ne.s32.totalorder %s49, %s50
    %p59 = scmp.eq.s32.totalorder %s18, 0
    %p60 = por %p58, %p59
    %p61 = scmp.ne.s32.totalorder %s49, %s50
    %p62 = scmp.eq.s32.totalorder %s19, 3
    %p63 = por %p61, %p62
    %p65 = scmp.ne.s32.totalorder %s50, %s64
    %p66 = scmp.eq.s32.totalorder %s19, 0
    %p67 = por %p65, %p66
    %s69 = sadd.s32 %s68, 1
    %p72 = scmp.eq.s32.totalorder %s13, 3
    %p73 = scmp.ne.s32.totalorder %s68, %s70
    %p74 = scmp.eq.s32.totalorder %s13, 0
    %p75 = por %p73, %p74
    %p76 = scmp.ne.s32.totalorder %s68, %s70
    %p77 = scmp.eq.s32.totalorder %s18, 3
    %p78 = por %p76, %p77
    %p79 = scmp.ne.s32.totalorder %s70, %s71
    %p80 = scmp.eq.s32.totalorder %s18, 0
    %p81 = por %p79, %p80
    %p82 = scmp.ne.s32.totalorder %s70, %s71
    %p83 = scmp.eq.s32.totalorder %s19, 3
    %p84 = por %p82, %p83
    %p86 = scmp.ne.s32.totalorder %s71, %s85
    %p87 = scmp.eq.s32.totalorder %s19, 0
    %p88 = por %p86, %p87
    %s90 = sadd.s32 %s89, 1
    %p93 = scmp.eq.s32.totalorder %s13, 3
    %p94 = scmp.ne.s32.totalorder %s89, %s91
    %p95 = scmp.eq.s32.totalorder %s13, 0
    %p96 = por %p94, %p95
    %p97 = scmp.ne.s32.totalorder %s89, %s91
    %p98 = scmp.eq.s32.totalorder %s18, 3
    %p99 = por %p97, %p98
    %p100 = scmp.ne.s32.totalorder %s91, %s92
    %p101 = scmp.eq.s32.totalorder %s18, 0
    %p102 = por %p100, %p101
    %p103 = scmp.ne.s32.totalorder %s91, %s92
    %p104 = scmp.eq.s32.totalorder %s19, 3
    %p105 = por %p103, %p104
    %p107 = scmp.ne.s32.totalorder %s92, %s106
    %p108 = scmp.eq.s32.totalorder %s19, 0
    %p109 = por %p107, %p108
    %s111 = sadd.s32 %s110, 1
    %p114 = scmp.eq.s32.totalorder %s13, 3
    %p115 = scmp.ne.s32.totalorder %s110, %s112
    %p116 = scmp.eq.s32.totalorder %s13, 0
    %p117 = por %p115, %p116
    %p118 = scmp.ne.s32.totalorder %s110, %s112
    %p119 = scmp.eq.s32.totalorder %s18, 3
    %p120 = por %p118, %p119
    %p121 = scmp.ne.s32.totalorder %s112, %s113
    %p122 = scmp.eq.s32.totalorder %s18, 0
    %p123 = por %p121, %p122
    %p124 = scmp.ne.s32.totalorder %s112, %s113
    %p125 = scmp.eq.s32.totalorder %s19, 3
    %p126 = por %p124, %p125
    %p128 = scmp.ne.s32.totalorder %s113, %s127
    %p129 = scmp.eq.s32.totalorder %s19, 0
    %p130 = por %p128, %p129
    %s132 = sadd.s32 %s131, 1
    %p135 = scmp.eq.s32.totalorder %s13, 3
    %p136 = scmp.ne.s32.totalorder %s131, %s133
    %p137 = scmp.eq.s32.totalorder %s13, 0
    %p138 = por %p136, %p137
    %p139 = scmp.ne.s32.totalorder %s131, %s133
    %p140 = scmp.eq.s32.totalorder %s18, 3
    %p141 = por %p139, %p140
    %p142 = scmp.ne.s32.totalorder %s133, %s134
    %p143 = scmp.eq.s32.totalorder %s18, 0
    %p144 = por %p142, %p143
    %p145 = scmp.ne.s32.totalorder %s133, %s134
    %p146 = scmp.eq.s32.totalorder %s19, 3
    %p147 = por %p145, %p146
    %p149 = scmp.ne.s32.totalorder %s134, %s148
    %p150 = scmp.eq.s32.totalorder %s19, 0
    %p151 = por %p149, %p150
    %s153 = sadd.s32 %s152, 1
    %p156 = scmp.eq.s32.totalorder %s13, 3
    %p157 = scmp.ne.s32.totalorder %s152, %s154
    %p158 = scmp.eq.s32.totalorder %s13, 0
    %p159 = por %p157, %p158
    %p160 = scmp.ne.s32.totalorder %s152, %s154
    %p161 = scmp.eq.s32.totalorder %s18, 3
    %p162 = por %p160, %p161
    %p163 = scmp.ne.s32.totalorder %s154, %s155
    %p164 = scmp.eq.s32.totalorder %s18, 0
    %p165 = por %p163, %p164
    %p166 = scmp.ne.s32.totalorder %s154, %s155
    %p167 = scmp.eq.s32.totalorder %s19, 3
    %p168 = por %p166, %p167
    %p170 = scmp.ne.s32.totalorder %s155, %s169
    %p171 = scmp.eq.s32.totalorder %s19, 0
    %p172 = por %p170, %p171
    %s173 = ssub.s32 %s13, %s20
    %p174 = scmp.eq.s32.totalorder %s173, 0
    %s176 = sadd.s32 %s175, 1
    %s177 = scalar_select %p174, %s175, %s176
    %p180 = pneg %p174
    %p181 = scmp.eq.s32.totalorder %s13, 3
    %p182 = por %p180, %p181
    %p183 = scmp.ne.s32.totalorder %s175, %s178
    %p184 = scmp.eq.s32.totalorder %s13, 0
    %p185 = por %p183, %p184
    %p186 = scmp.ne.s32.totalorder %s175, %s178
    %p187 = scmp.eq.s32.totalorder %s18, 3
    %p188 = por %p186, %p187
    %p189 = scmp.ne.s32.totalorder %s178, %s179
    %p190 = scmp.eq.s32.totalorder %s18, 0
    %p191 = por %p189, %p190
    %p192 = scmp.ne.s32.totalorder %s178, %s179
    %p193 = scmp.eq.s32.totalorder %s19, 3
    %p194 = por %p192, %p193
    %p196 = scmp.ne.s32.totalorder %s179, %s195
    %p197 = scmp.eq.s32.totalorder %s19, 0
    %p198 = por %p196, %p197
    %p199 = scmp.le.s32.totalorder 1, %s13
    %p200 = scmp.lt.s32.totalorder %s13, 5
    %p201 = pnand %p199, %p200
    %p202 = pneg %p201
    // Predicated region
    $region9: #{_mlp_pallas.1} parent=5 // pred_check
      _
    $region10: #{_mlp_pallas.1} parent=5 // pred_check_branch
      %204 = sbr.rel (%p201) target = $region12
    $region11: #{_mlp_pallas.1} parent=5 // pred_region
      %s205 = ssub.s32 %s13, 1
      // Predicated region
      $region13: #{_mlp_pallas.1} parent=11 // pred_check
        %p206 = pneg %p60
      $region14: #{_mlp_pallas.1} parent=11 // pred_check_branch
        %208 = sbr.rel (%p206) target = $region16
      $region15: #{_mlp_pallas.1} parent=11 // pred_region
        _
      $region16: #{_mlp_pallas.1} parent=11 // pred_fallthru
        _
      // Predicated region
      $region17: #{_mlp_pallas.1} parent=11 // pred_check
        %p209 = pneg %p81
      $region18: #{_mlp_pallas.1} parent=11 // pred_check_branch
        %211 = sbr.rel (%p209) target = $region20
      $region19: #{_mlp_pallas.1} parent=11 // pred_region
        _
      $region20: #{_mlp_pallas.1} parent=11 // pred_fallthru
        _
      // Predicated region
      $region21: #{_mlp_pallas.1} parent=11 // pred_check
        %p212 = pneg %p102
      $region22: #{_mlp_pallas.1} parent=11 // pred_check_branch
        %214 = sbr.rel (%p212) target = $region24
      $region23: #{_mlp_pallas.1} parent=11 // pred_region
        _
      $region24: #{_mlp_pallas.1} parent=11 // pred_fallthru
        _
      // Predicated region
      $region25: #{_mlp_pallas.1} parent=11 // pred_check
        %p215 = pneg %p123
      $region26: #{_mlp_pallas.1} parent=11 // pred_check_branch
        %217 = sbr.rel (%p215) target = $region28
      $region27: #{_mlp_pallas.1} parent=11 // pred_region
        _
      $region28: #{_mlp_pallas.1} parent=11 // pred_fallthru
        _
      // Predicated region
      $region29: #{_mlp_pallas.1} parent=11 // pred_check
        %p218 = pneg %p144
      $region30: #{_mlp_pallas.1} parent=11 // pred_check_branch
        %220 = sbr.rel (%p218) target = $region32
      $region31: #{_mlp_pallas.1} parent=11 // pred_region
        _
      $region32: #{_mlp_pallas.1} parent=11 // pred_fallthru
        _
      // Predicated region
      $region33: #{_mlp_pallas.1} parent=11 // pred_check
        %p221 = pneg %p165
      $region34: #{_mlp_pallas.1} parent=11 // pred_check_branch
        %223 = sbr.rel (%p221) target = $region36
      $region35: #{_mlp_pallas.1} parent=11 // pred_region
        _
      $region36: #{_mlp_pallas.1} parent=11 // pred_fallthru
        _
    $region12: #{_mlp_pallas.1} parent=5 // pred_fallthru
      _
    %p224 = scmp.lt.s32.totalorder %s13, 4
    // Predicated region
    $region37: #{_mlp_pallas.1} parent=5 // pred_check
      %p225 = pneg %p224
    $region38: #{_mlp_pallas.1} parent=5 // pred_check_branch
      %227 = sbr.rel (%p225) target = $region40
    $region39: #{_mlp_pallas.1} parent=5 // pred_region
      // Predicated region
      $region41: #{_mlp_pallas.1} parent=39 // pred_check
        %p228 = pneg %p33
      $region42: #{_mlp_pallas.1} parent=39 // pred_check_branch
        %230 = sbr.rel (%p228) target = $region44
      $region43: #{_mlp_pallas.1} parent=39 // pred_region
        %s231 = smul.u32 2, %s13
        %p232 = scmp.lt.s32.totalorder %s231, 7
        %s233 = scalar_select %p232, %s231, 7
        %s234 = smul.addr %s233, 4
        %s235 = scalar_lea.vmem %s0, %s234
        %s236 = smul.u32 2, %s13
      $region44: #{_mlp_pallas.1} parent=39 // pred_fallthru
        _
    $region40: #{_mlp_pallas.1} parent=5 // pred_fallthru
      _
    %p237 = scmp.le.s32.totalorder 1, %s13
    %p238 = scmp.lt.s32.totalorder %s13, 5
    %p239 = pnand %p237, %p238
    %p240 = pneg %p239
    // Predicated region
    $region45: #{_mlp_pallas.1} parent=5 // pred_check
      _
    $region46: #{_mlp_pallas.1} parent=5 // pred_check_branch
      %242 = sbr.rel (%p239) target = $region48
    $region47: #{_mlp_pallas.1} parent=5 // pred_region
      %s243 = ssub.s32 %s13, 1
      %s244 = smul.u32 2, %s18
      %p245 = scmp.lt.s32.totalorder %s244, 7
      %s246 = scalar_select %p245, %s244, 7
      %s247 = smul.addr %s246, 4
      %s248 = scalar_lea.vmem %s0, %s247
      %p249 = pneg %p39
      %p250 = pneg %p36
      %p251 = pneg %p60
      %p252 = pneg %p57
      %p253 = pneg %p81
      %p254 = pneg %p78
      %p255 = pneg %p102
      %p256 = pneg %p99
      %p257 = pneg %p123
      %p258 = pneg %p120
      %p259 = pneg %p144
      %p260 = pneg %p141
      %p261 = pneg %p165
      %p262 = pneg %p162
      %p263 = pneg %p191
      %p264 = pneg %p188
      %s265 = smul.u32 2, %s18
      %p266 = scmp.lt.s32.totalorder %s265, 7
      %s267 = scalar_select %p266, %s265, 7
      %s268 = smul.addr %s267, 2
      %s269 = scalar_lea.vmem %s7, %s268
      %s270 = smul.u32 2, %s18
      %p271 = scmp.lt.s32.totalorder %s270, 7
      %s272 = scalar_select %p271, %s270, 7
      %s273 = smul.addr %s272, 4
      %s274 = scalar_lea.vmem %s0, %s273
      %s275 = smul.u32 2, %s18
      %s276 = smul.u32 2, %s18
      %p277 = scmp.lt.s32.totalorder %s276, 7
      %s278 = scalar_select %p277, %s276, 7
      %s279 = smul.addr %s278, 2
      %s280 = scalar_lea.vmem %s7, %s279
      %s281 = smul.u32 2, %s18
      %v282 = vld [vmem:[%s274] sm:$0xff]
      %v283 = vld [vmem:[%s1] sm:$0xff]
      %v284 = vld [vmem:[%s1 + $0x8] sm:$0xff]
      %v285 = vld [vmem:[%s1 + $0x10] sm:$0xff]
      %v286 = vld [vmem:[%s1 + $0x18] sm:$0xff]
      %v287 = vld [vmem:[%s2] sm:$0xff]
      %v288 = vld [vmem:[%s2 + $0x8] sm:$0xff]
      %v289 = vld [vmem:[%s2 + $0x10] sm:$0xff]
      %v290 = vld [vmem:[%s2 + $0x18] sm:$0xff]
      %292 = vset.pattern.permute.xlu0 0
      %293 = vperm.xlu0 %292, %v287
      %v294 = vpop.permute.xlu0 %293
      %297 = vset.pattern.permute.xlu0 0
      %298 = vperm.xlu0 %297, %v288
      %v299 = vpop.permute.xlu0 %298
      %302 = vset.pattern.permute.xlu0 0
      %303 = vperm.xlu0 %302, %v289
      %v304 = vpop.permute.xlu0 %303
      %307 = vset.pattern.permute.xlu0 0
      %308 = vperm.xlu0 %307, %v290
      %v309 = vpop.permute.xlu0 %308
      %v312 = vcombine.high %v282, %v282
      %vm313 = vcmask 31744
      %v315 = vsel %vm313, %v283, 0
      %v318 = vsel %vm313, %v284, 0
      %v321 = vsel %vm313, %v285, 0
      %v324 = vsel %vm313, %v286, 0
      %vm326 = vcmask 1043456
      %v327 = vsel %vm326, %v282, 0
      %v329 = vsel %vm326, %v312, 0
      %331 = vmatprep.subr.mxu0 %v329
      %332 = vmatpush1.msra.mxu0 %v327
      %333 = vmatprep.subr.mxu0 0.0
      %334 = vmatpush1.msra.mxu0 0.0
      %335 = vmatprep.subr.mxu0 0.0
      %336 = vmatpush1.msra.mxu0 0.0
      %337 = vmatprep.subr.mxu0 0.0
      %338 = vmatpush1.msra.mxu0 0.0
      %339 = vmatprep.subr.mxu0 0.0
      %340 = vmatpush1.msra.mxu0 0.0
      %341 = vmatprep.subr.mxu0 0.0
      %342 = vmatpush1.msra.mxu0 0.0
      %343 = vmatprep.subr.mxu0 0.0
      %344 = vmatpush1.msra.mxu0 0.0
      %345 = vmatprep.subr.mxu0 0.0
      %346 = vmatpush1.msra.mxu0 0.0
      %347 = vmatprep.subr.mxu0 0.0
      %348 = vmatpush1.msra.mxu0 0.0
      %349 = vmatprep.subr.mxu0 0.0
      %350 = vmatpush1.msra.mxu0 0.0
      %351 = vmatprep.subr.mxu0 0.0
      %352 = vmatpush1.msra.mxu0 0.0
      %353 = vmatprep.subr.mxu0 0.0
      %354 = vmatpush1.msra.mxu0 0.0
      %355 = vmatprep.subr.mxu0 0.0
      %356 = vmatpush1.msra.mxu0 0.0
      %357 = vmatprep.subr.mxu0 0.0
      %358 = vmatpush1.msra.mxu0 0.0
      %359 = vmatprep.subr.mxu0 0.0
      %360 = vmatpush1.msra.mxu0 0.0
      %361 = vmatprep.subr.mxu0 0.0
      %362 = vmatpush1.msra.mxu0 0.0
      %363 = vmatprep.subr.mxu0 0.0
      %364 = vmatpush1.msra.mxu0 0.0
      %365 = vmatprep.subr.mxu0 0.0
      %366 = vmatpush1.msra.mxu0 0.0
      %367 = vmatprep.subr.mxu0 0.0
      %368 = vmatpush1.msra.mxu0 0.0
      %369 = vmatprep.subr.mxu0 0.0
      %370 = vmatpush1.msra.mxu0 0.0
      %371 = vmatprep.subr.mxu0 0.0
      %372 = vmatpush1.msra.mxu0 0.0
      %373 = vmatprep.subr.mxu0 0.0
      %374 = vmatpush1.msra.mxu0 0.0
      %375 = vmatprep.subr.mxu0 0.0
      %376 = vmatpush1.msra.mxu0 0.0
      %377 = vmatprep.subr.mxu0 0.0
      %378 = vmatpush1.msra.mxu0 0.0
      %379 = vmatprep.subr.mxu0 0.0
      %380 = vmatpush1.msra.mxu0 0.0
      %381 = vmatprep.subr.mxu0 0.0
      %382 = vmatpush1.msra.mxu0 0.0
      %383 = vmatprep.subr.mxu0 0.0
      %384 = vmatpush1.msra.mxu0 0.0
      %385 = vmatprep.subr.mxu0 0.0
      %386 = vmatpush1.msra.mxu0 0.0
      %387 = vmatprep.subr.mxu0 0.0
      %388 = vmatpush1.msra.mxu0 0.0
      %389 = vmatprep.subr.mxu0 0.0
      %390 = vmatpush1.msra.mxu0 0.0
      %391 = vmatprep.subr.mxu0 0.0
      %392 = vmatpush1.msra.mxu0 0.0
      %393 = vmatprep.subr.mxu0 0.0
      %394 = vmatpush1.msra.mxu0 0.0
      %395 = vmatprep.mubr.f32.mxu0 0.0
      %396 = vmatmul.mubr.f32.gmra.mrb[0].mxu0 %v315
      %v397 = vpop.f32.mrb[0].mxu0
      %v398 = vadd.f32 %v294, %v397
      %v399 = vpop.f32.mrb[0].mxu0
      %v400 = vadd.f32 %v294, %v399
      %401 = vmatprep.mubr.f32.mxu0 0.0
      %402 = vmatmul.mubr.f32.gmra.mrb[0].mxu0 %v318
      %v403 = vpop.f32.mrb[0].mxu0
      %v404 = vadd.f32 %v299, %v403
      %v405 = vpop.f32.mrb[0].mxu0
      %v406 = vadd.f32 %v299, %v405
      %407 = vmatprep.mubr.f32.mxu0 0.0
      %408 = vmatmul.mubr.f32.gmra.mrb[0].mxu0 %v321
      %v409 = vpop.f32.mrb[0].mxu0
      %v410 = vadd.f32 %v304, %v409
      %v411 = vpop.f32.mrb[0].mxu0
      %v412 = vadd.f32 %v304, %v411
      %413 = vmatprep.mubr.f32.mxu0 0.0
      %414 = vmatmul.mubr.f32.gmra.mrb[0].mxu0 %v324
      %v415 = vpop.f32.mrb[0].mxu0
      %v416 = vadd.f32 %v309, %v415
      %v417 = vpop.f32.mrb[0].mxu0
      %v418 = vadd.f32 %v309, %v417
      %419 = vdwg.mxu0
      %v420 = vmax.f32 %v398, 0.0
      %v421 = vmax.f32 %v400, 0.0
      %v422 = vmax.f32 %v404, 0.0
      %v423 = vmax.f32 %v406, 0.0
      %v424 = vmax.f32 %v410, 0.0
      %v425 = vmax.f32 %v412, 0.0
      %v426 = vmax.f32 %v416, 0.0
      %v427 = vmax.f32 %v418, 0.0
      %v428 = vld [vmem:[%s3] sm:$0xff]
      %v429 = vld [vmem:[%s3 + $0x8] sm:$0xff]
      %v430 = vld [vmem:[%s4] sm:$0xff]
      %v431 = vld [vmem:[%s4 + $0x8] sm:$0xff]
      %433 = vset.pattern.permute.xlu0 0
      %434 = vperm.xlu0 %433, %v430
      %v435 = vpop.permute.xlu0 %434
      %438 = vset.pattern.permute.xlu0 0
      %439 = vperm.xlu0 %438, %v431
      %v440 = vpop.permute.xlu0 %439
      %vm442 = vcmask 261120
      %v444 = vsel %vm442, %v428, 0
      %v447 = vsel %vm442, %v429, 0
      %449 = vmatprep.subr.mxu0 %v421
      %450 = vmatpush1.msra.mxu0 %v420
      %451 = vmatprep.subr.mxu0 %v423
      %452 = vmatpush1.msra.mxu0 %v422
      %453 = vmatprep.subr.mxu0 %v425
      %454 = vmatpush1.msra.mxu0 %v424
      %455 = vmatprep.subr.mxu0 %v427
      %456 = vmatpush1.msra.mxu0 %v426
      %457 = vmatprep.subr.mxu0 0.0
      %458 = vmatpush1.msra.mxu0 0.0
      %459 = vmatprep.subr.mxu0 0.0
      %460 = vmatpush1.msra.mxu0 0.0
      %461 = vmatprep.subr.mxu0 0.0
      %462 = vmatpush1.msra.mxu0 0.0
      %463 = vmatprep.subr.mxu0 0.0
      %464 = vmatpush1.msra.mxu0 0.0
      %465 = vmatprep.subr.mxu0 0.0
      %466 = vmatpush1.msra.mxu0 0.0
      %467 = vmatprep.subr.mxu0 0.0
      %468 = vmatpush1.msra.mxu0 0.0
      %469 = vmatprep.subr.mxu0 0.0
      %470 = vmatpush1.msra.mxu0 0.0
      %471 = vmatprep.subr.mxu0 0.0
      %472 = vmatpush1.msra.mxu0 0.0
      %473 = vmatprep.subr.mxu0 0.0
      %474 = vmatpush1.msra.mxu0 0.0
      %475 = vmatprep.subr.mxu0 0.0
      %476 = vmatpush1.msra.mxu0 0.0
      %477 = vmatprep.subr.mxu0 0.0
      %478 = vmatpush1.msra.mxu0 0.0
      %479 = vmatprep.subr.mxu0 0.0
      %480 = vmatpush1.msra.mxu0 0.0
      %481 = vmatprep.subr.mxu0 0.0
      %482 = vmatpush1.msra.mxu0 0.0
      %483 = vmatprep.subr.mxu0 0.0
      %484 = vmatpush1.msra.mxu0 0.0
      %485 = vmatprep.subr.mxu0 0.0
      %486 = vmatpush1.msra.mxu0 0.0
      %487 = vmatprep.subr.mxu0 0.0
      %488 = vmatpush1.msra.mxu0 0.0
      %489 = vmatprep.subr.mxu0 0.0
      %490 = vmatpush1.msra.mxu0 0.0
      %491 = vmatprep.subr.mxu0 0.0
      %492 = vmatpush1.msra.mxu0 0.0
      %493 = vmatprep.subr.mxu0 0.0
      %494 = vmatpush1.msra.mxu0 0.0
      %495 = vmatprep.subr.mxu0 0.0
      %496 = vmatpush1.msra.mxu0 0.0
      %497 = vmatprep.subr.mxu0 0.0
      %498 = vmatpush1.msra.mxu0 0.0
      %499 = vmatprep.subr.mxu0 0.0
      %500 = vmatpush1.msra.mxu0 0.0
      %501 = vmatprep.subr.mxu0 0.0
      %502 = vmatpush1.msra.mxu0 0.0
      %503 = vmatprep.subr.mxu0 0.0
      %504 = vmatpush1.msra.mxu0 0.0
      %505 = vmatprep.subr.mxu0 0.0
      %506 = vmatpush1.msra.mxu0 0.0
      %507 = vmatprep.subr.mxu0 0.0
      %508 = vmatpush1.msra.mxu0 0.0
      %509 = vmatprep.subr.mxu0 0.0
      %510 = vmatpush1.msra.mxu0 0.0
      %511 = vmatprep.subr.mxu0 0.0
      %512 = vmatpush1.msra.mxu0 0.0
      %513 = vmatprep.mubr.f32.mxu0 0.0
      %514 = vmatmul.mubr.f32.gmra.mrb[0].mxu0 %v444
      %v515 = vpop.f32.mrb[0].mxu0
      %v516 = vadd.f32 %v435, %v515
      %v517 = vpop.f32.mrb[0].mxu0
      %v518 = vadd.f32 %v435, %v517
      %519 = vmatprep.mubr.f32.mxu0 0.0
      %520 = vmatmul.mubr.f32.gmra.mrb[0].mxu0 %v447
      %v521 = vpop.f32.mrb[0].mxu0
      %v522 = vadd.f32 %v440, %v521
      %v523 = vpop.f32.mrb[0].mxu0
      %v524 = vadd.f32 %v440, %v523
      %525 = vdwg.mxu0
      %v526 = vmax.f32 %v516, 0.0
      %v527 = vmax.f32 %v518, 0.0
      %v528 = vmax.f32 %v522, 0.0
      %v529 = vmax.f32 %v524, 0.0
      %v530 = vld [vmem:[%s5] sm:$0x3]
      %v531 = vld [vmem:[%s6] sm:$0x3]
      %533 = vset.pattern.permute.xlu0 0
      %534 = vperm.xlu0 %533, %v531
      %v535 = vpop.permute.xlu0 %534
      %vm537 = vcmask 130048
      %v539 = vsel %vm537, %v530, 0
      %541 = vmatprep.subr.mxu0 %v527
      %542 = vmatpush1.msra.mxu0 %v526
      %543 = vmatprep.subr.mxu0 %v529
      %544 = vmatpush1.msra.mxu0 %v528
      %545 = vmatprep.subr.mxu0 0.0
      %546 = vmatpush1.msra.mxu0 0.0
      %547 = vmatprep.subr.mxu0 0.0
      %548 = vmatpush1.msra.mxu0 0.0
      %549 = vmatprep.subr.mxu0 0.0
      %550 = vmatpush1.msra.mxu0 0.0
      %551 = vmatprep.subr.mxu0 0.0
      %552 = vmatpush1.msra.mxu0 0.0
      %553 = vmatprep.subr.mxu0 0.0
      %554 = vmatpush1.msra.mxu0 0.0
      %555 = vmatprep.subr.mxu0 0.0
      %556 = vmatpush1.msra.mxu0 0.0
      %557 = vmatprep.subr.mxu0 0.0
      %558 = vmatpush1.msra.mxu0 0.0
      %559 = vmatprep.subr.mxu0 0.0
      %560 = vmatpush1.msra.mxu0 0.0
      %561 = vmatprep.subr.mxu0 0.0
      %562 = vmatpush1.msra.mxu0 0.0
      %563 = vmatprep.subr.mxu0 0.0
      %564 = vmatpush1.msra.mxu0 0.0
      %565 = vmatprep.subr.mxu0 0.0
      %566 = vmatpush1.msra.mxu0 0.0
      %567 = vmatprep.subr.mxu0 0.0
      %568 = vmatpush1.msra.mxu0 0.0
      %569 = vmatprep.subr.mxu0 0.0
      %570 = vmatpush1.msra.mxu0 0.0
      %571 = vmatprep.subr.mxu0 0.0
      %572 = vmatpush1.msra.mxu0 0.0
      %573 = vmatprep.subr.mxu0 0.0
      %574 = vmatpush1.msra.mxu0 0.0
      %575 = vmatprep.subr.mxu0 0.0
      %576 = vmatpush1.msra.mxu0 0.0
      %577 = vmatprep.subr.mxu0 0.0
      %578 = vmatpush1.msra.mxu0 0.0
      %579 = vmatprep.subr.mxu0 0.0
      %580 = vmatpush1.msra.mxu0 0.0
      %581 = vmatprep.subr.mxu0 0.0
      %582 = vmatpush1.msra.mxu0 0.0
      %583 = vmatprep.subr.mxu0 0.0
      %584 = vmatpush1.msra.mxu0 0.0
      %585 = vmatprep.subr.mxu0 0.0
      %586 = vmatpush1.msra.mxu0 0.0
      %587 = vmatprep.subr.mxu0 0.0
      %588 = vmatpush1.msra.mxu0 0.0
      %589 = vmatprep.subr.mxu0 0.0
      %590 = vmatpush1.msra.mxu0 0.0
      %591 = vmatprep.subr.mxu0 0.0
      %592 = vmatpush1.msra.mxu0 0.0
      %593 = vmatprep.subr.mxu0 0.0
      %594 = vmatpush1.msra.mxu0 0.0
      %595 = vmatprep.subr.mxu0 0.0
      %596 = vmatpush1.msra.mxu0 0.0
      %597 = vmatprep.subr.mxu0 0.0
      %598 = vmatpush1.msra.mxu0 0.0
      %599 = vmatprep.subr.mxu0 0.0
      %600 = vmatpush1.msra.mxu0 0.0
      %601 = vmatprep.subr.mxu0 0.0
      %602 = vmatpush1.msra.mxu0 0.0
      %603 = vmatprep.subr.mxu0 0.0
      %604 = vmatpush1.msra.mxu0 0.0
      %605 = vmatprep.mubr.f32.mxu0 0.0
      %606 = vmatmul.mubr.f32.gmra.mrb[0].mxu0 %v539
      %v607 = vpop.f32.mrb[0].mxu0
      %v608 = vadd.f32 %v535, %v607
      %v609 = vpop.f32.mrb[0].mxu0
      %v610 = vadd.f32 %v535, %v609
      %611 = vdwg.mxu0
      %v614 = vcombine.low %v608, %v610
      %v616 = vunpack.c.l.s4 1983009808
      %v617 = vunpack.c.0.s8 %v616
      %v618 = vlaneseq
      %v619 = vshrl.u32 %v618, 7
      %v620 = vsub.s32 %v617, %v619
      %v621 = vrot.slane %v614, %v620
      %623 = vst [vmem:[%s280] sm:$0xf] %v621
      %s624 = smul.u32 2, %s18
      %p625 = scmp.lt.s32.totalorder %s624, 7
      %s626 = scalar_select %p625, %s624, 7
      %s627 = smul.addr %s626, 2
      %s628 = scalar_lea.vmem %s7, %s627
      // Predicated region
      $region49: #{_mlp_pallas.1} parent=47 // pred_check
        %p629 = pneg %p188
      $region50: #{_mlp_pallas.1} parent=47 // pred_check_branch
        %631 = sbr.rel (%p629) target = $region52
      $region51: #{_mlp_pallas.1} parent=47 // pred_region
        %s632 = smul.u32 2, %s18
      $region52: #{_mlp_pallas.1} parent=47 // pred_fallthru
        _
    $region48: #{_mlp_pallas.1} parent=5 // pred_fallthru
      _
    %p633 = scmp.le.s32.totalorder 2, %s13
    // Predicated region
    $region53: #{_mlp_pallas.1} parent=5 // pred_check
      %p634 = pneg %p633
    $region54: #{_mlp_pallas.1} parent=5 // pred_check_branch
      %636 = sbr.rel (%p634) target = $region56
    $region55: #{_mlp_pallas.1} parent=5 // pred_region
      %s637 = ssub.s32 %s13, 2
      // Predicated region
      $region57: #{_mlp_pallas.1} parent=55 // pred_check
        %p638 = pneg %p194
      $region58: #{_mlp_pallas.1} parent=55 // pred_check_branch
        %640 = sbr.rel (%p638) target = $region60
      $region59: #{_mlp_pallas.1} parent=55 // pred_region
        %s641 = smul.u32 2, %s19
        %p642 = scmp.lt.s32.totalorder %s641, 7
        %s643 = scalar_select %p642, %s641, 7
        %s644 = smul.addr %s643, 2
        %s645 = scalar_lea.vmem %s7, %s644
      $region60: #{_mlp_pallas.1} parent=55 // pred_fallthru
        _
    $region56: #{_mlp_pallas.1} parent=5 // pred_fallthru
      _
  $region6: #{_mlp_pallas.1} parent=0 // loop_footer
    %s17 = sadd.s32 1, %s13
  $region7: #{_mlp_pallas.1} parent=0 // loop_footer_branch
    %12 = sbr.rel target = $region3
  $region8: #{_mlp_pallas.1} parent=0 // loop_exit
    _

</llo_original>
